<compile_context>
chip_gen: v6e
topology: v6e:2x2x1
jax: 0.10.0
libtpu: 0.0.40
codegen_flags: <defaults>
</compile_context>

<pallas_src>
import jax
import jax.numpy as jnp
from jax.experimental import pallas as pl
from jax.experimental.pallas import tpu as pltpu


def _round_up(x, m):
    return (x + m - 1) // m * m


def _labelwise_mlc_kernel(x_ref, w_ref, b_ref, o_ref, acc_ref):
    # x_ref:   (TB, TL, TD)  doc_rep tile
    # w_ref:   (TL, TD)      weight tile
    # b_ref:   (1, TL)       bias tile
    # o_ref:   (TB, TL)      output tile (resident across the reduction axis)
    # acc_ref: (TB, TL) f32  accumulator scratch
    d = pl.program_id(2)

    @pl.when(d == 0)
    def _init():
        acc_ref[...] = jnp.zeros_like(acc_ref)

    x = x_ref[...].astype(jnp.float32)            # (TB, TL, TD)
    w = w_ref[...].astype(jnp.float32)            # (TL, TD)
    acc_ref[...] += jnp.sum(x * w[None, :, :], axis=-1)

    @pl.when(d == pl.num_programs(2) - 1)
    def _finalize():
        logits = acc_ref[...] + b_ref[...].astype(jnp.float32)   # (TB, TL)
        o_ref[...] = jax.nn.sigmoid(logits).astype(o_ref.dtype)


def labelwise_mlc(doc_rep, weight, bias, *, x_tile_bytes=4 * 1024 * 1024):
    """doc_rep: (B, L, D), weight: (L, D), bias: (L,) -> sigmoid(diag logits) (B, L)."""
    B, L, D = doc_rep.shape
    assert weight.shape == (L, D)
    assert bias.shape == (L,)
    out_dtype = doc_rep.dtype

    # ---- static tile / padding choices -------------------------------------
    # Reduction axis (lanes of x and w): pad to 128, tile at <= 512.
    Dp = _round_up(D, 128)
    TD = next(t for t in (512, 256, 128) if Dp % t == 0)

    # Label axis (lanes of the output): tile lane-dense when large, keep
    # full-extent when tiny so input traffic isn't inflated just for the store.
    if L >= 128:
        Lp = _round_up(L, 128)
        TL = next(t for t in (512, 256, 128) if Lp % t == 0)
    else:
        Lp = _round_up(L, 8)
        TL = Lp

    # Batch axis: as many rows per step as fit the x-tile budget; multiple of 8
    # because TB is the sublane axis of the (TB, TL) output block.
    tb_budget = max(8, (x_tile_bytes // (TL * TD * 4)) // 8 * 8)
    TB = min(tb_budget, _round_up(B, 8))
    Bp = _round_up(B, TB)

    grid = (Bp // TB, Lp // TL, Dp // TD)

    # ---- zero-pad operands to blocked shapes (zeros are exact no-ops for the
    # dot product; padded rows/labels are sliced off the output) -------------
    if (Bp, Lp, Dp) != (B, L, D):
        doc_rep = jnp.pad(doc_rep, ((0, Bp - B), (0, Lp - L), (0, Dp - D)))
    if (Lp, Dp) != (L, D):
        weight = jnp.pad(weight, ((0, Lp - L), (0, Dp - D)))
    if Lp != L:
        bias = jnp.pad(bias, (0, Lp - L))
    bias2d = bias.reshape(1, Lp)

    out = pl.pallas_call(
        _labelwise_mlc_kernel,
        out_shape=jax.ShapeDtypeStruct((Bp, Lp), out_dtype),
        grid_spec=pltpu.PrefetchScalarGridSpec(
            num_scalar_prefetch=0,
            grid=grid,
            in_specs=[
                pl.BlockSpec((TB, TL, TD), lambda b, l, d: (b, l, d)),
                pl.BlockSpec((TL, TD), lambda b, l, d: (l, d)),
                pl.BlockSpec((1, TL), lambda b, l, d: (0, l)),
            ],
            out_specs=pl.BlockSpec((TB, TL), lambda b, l, d: (b, l)),
            scratch_shapes=[pltpu.VMEM((TB, TL), jnp.float32)],
        ),
        compiler_params=pltpu.CompilerParams(
            dimension_semantics=("parallel", "parallel", "arbitrary"),
            vmem_limit_bytes=48 * 1024 * 1024,
        ),
    )(doc_rep, weight, bias2d)

    return out[:B, :L]


def labelwise_mlc_ref(doc_rep, weight, bias):
    # pure-JAX reference mirroring the PyTorch forward (full matmul + diagonal).
    doc_label = jnp.einsum("bld,kd->blk", doc_rep, weight,
                           precision=jax.lax.Precision.HIGHEST)
    doc_label = doc_label + bias[None, None, :]
    diag = jnp.diagonal(doc_label, axis1=1, axis2=2)   # (B, L)
    return jax.nn.sigmoid(diag)


def _make_inputs(key, batch, label_size, input_size):
    k_x, k_w, k_b = jax.random.split(key, 3)
    # PyTorch Linear-style uniform(-1/sqrt(D), 1/sqrt(D)) init.
    bound = 1.0 / (input_size ** 0.5)
    weight = jax.random.uniform(k_w, (label_size, input_size), jnp.float32,
                                minval=-bound, maxval=bound)
    bias = jax.random.uniform(k_b, (label_size,), jnp.float32,
                              minval=-bound, maxval=bound)
    doc_rep = jax.random.normal(k_x, (batch, label_size, input_size), jnp.float32)
    return doc_rep, weight, bias


if __name__ == "__main__":
    # Small shape implied by the module: batch=2, label_size=8, input_size=32.
    doc_rep, weight, bias = _make_inputs(jax.random.PRNGKey(0), 2, 8, 32)
    out = jax.block_until_ready(labelwise_mlc(doc_rep, weight, bias))
    ref = labelwise_mlc_ref(doc_rep, weight, bias)
    assert out.shape == (2, 8)
    assert jnp.allclose(out, ref, atol=1e-5, rtol=1e-5), "mismatch (small shape)"

    # Slightly larger shape that exercises padding + the tiled reduction path.
    doc_rep, weight, bias = _make_inputs(jax.random.PRNGKey(1), 4, 160, 300)
    out = jax.block_until_ready(labelwise_mlc(doc_rep, weight, bias))
    ref = labelwise_mlc_ref(doc_rep, weight, bias)
    assert out.shape == (4, 160)
    assert jnp.allclose(out, ref, atol=1e-5, rtol=1e-5), "mismatch (tiled shape)"

    print("KERNEL_OK")
</pallas_src>

<mosaic_0001>
module attributes {stable_mosaic.version = 11 : i64} {
  func.func @_labelwise_mlc_kernel(%arg0: i32, %arg1: i32, %arg2: i32, %arg3: memref<8x8x128xf32, #tpu.memory_space<vmem>>, %arg4: memref<8x128xf32, #tpu.memory_space<vmem>>, %arg5: memref<1x8xf32, #tpu.memory_space<vmem>>, %arg6: memref<8x8xf32, #tpu.memory_space<vmem>>, %arg7: memref<8x8xf32, #tpu.memory_space<vmem>>) attributes {dimension_semantics = [#tpu.dimension_semantics<parallel>, #tpu.dimension_semantics<parallel>, #tpu.dimension_semantics<arbitrary>], iteration_bounds = array<i64: 1, 1, 1>, scalar_prefetch = 0 : i64, scratch_operands = 1 : i64, tpu.core_type = #tpu.core_type<tc>, window_params = [{transform_indices = @transform_0, window_bounds = array<i64: 8, 8, 128>}, {transform_indices = @transform_1, window_bounds = array<i64: 8, 128>}, {transform_indices = @transform_2, window_bounds = array<i64: 1, 8>}, {transform_indices = @transform_3, window_bounds = array<i64: 8, 8>}]} {
    %c0_i32 = arith.constant 0 : i32
    %0 = arith.cmpi eq, %arg2, %c0_i32 : i32
    %1 = arith.extui %0 : i1 to i32
    %c0_i32_0 = arith.constant 0 : i32
    %2 = arith.cmpi ne, %1, %c0_i32_0 : i32
    scf.if %2 {
      %cst_11 = arith.constant 0.000000e+00 : f32
      %15 = vector.broadcast %cst_11 : f32 to vector<8x8xf32>
      %c0_12 = arith.constant 0 : index
      %c0_13 = arith.constant 0 : index
      %16 = vector.load %arg7[%c0_12, %c0_13] : memref<8x8xf32, #tpu.memory_space<vmem>>, vector<8x8xf32>
      tpu.vector_store %arg7[%c0_12, %c0_13], %15 {strides = array<i32>} : memref<8x8xf32, #tpu.memory_space<vmem>>, vector<8x8xf32>,
    } else {
    }
    %c0 = arith.constant 0 : index
    %c0_1 = arith.constant 0 : index
    %c0_2 = arith.constant 0 : index
    %3 = vector.load %arg3[%c0, %c0_1, %c0_2] : memref<8x8x128xf32, #tpu.memory_space<vmem>>, vector<8x8x128xf32>
    %c0_3 = arith.constant 0 : index
    %c0_4 = arith.constant 0 : index
    %4 = vector.load %arg4[%c0_3, %c0_4] : memref<8x128xf32, #tpu.memory_space<vmem>>, vector<8x128xf32>
    %c0_5 = arith.constant 0 : index
    %c0_6 = arith.constant 0 : index
    %5 = vector.load %arg7[%c0_5, %c0_6] : memref<8x8xf32, #tpu.memory_space<vmem>>, vector<8x8xf32>
    %6 = vector.shape_cast %4 : vector<8x128xf32> to vector<1x8x128xf32>
    %7 = vector.broadcast %6 : vector<1x8x128xf32> to vector<8x8x128xf32>
    %8 = arith.mulf %3, %7 : vector<8x8x128xf32>
    %cst = arith.constant dense<0.000000e+00> : vector<8x8xf32>
    %9 = vector.multi_reduction <add>, %8, %cst [2] : vector<8x8x128xf32> to vector<8x8xf32>
    %10 = arith.addf %5, %9 : vector<8x8xf32>
    %c0_7 = arith.constant 0 : index
    %c0_8 = arith.constant 0 : index
    %11 = vector.load %arg7[%c0_7, %c0_8] : memref<8x8xf32, #tpu.memory_space<vmem>>, vector<8x8xf32>
    tpu.vector_store %arg7[%c0_7, %c0_8], %10 {strides = array<i32>} : memref<8x8xf32, #tpu.memory_space<vmem>>, vector<8x8xf32>,
    %c0_i32_9 = arith.constant 0 : i32
    %12 = arith.cmpi eq, %arg2, %c0_i32_9 : i32
    %13 = arith.extui %12 : i1 to i32
    %c0_i32_10 = arith.constant 0 : i32
    %14 = arith.cmpi ne, %13, %c0_i32_10 : i32
    scf.if %14 {
      %c0_11 = arith.constant 0 : index
      %c0_12 = arith.constant 0 : index
      %15 = vector.load %arg7[%c0_11, %c0_12] : memref<8x8xf32, #tpu.memory_space<vmem>>, vector<8x8xf32>
      %c0_13 = arith.constant 0 : index
      %c0_14 = arith.constant 0 : index
      %16 = vector.load %arg5[%c0_13, %c0_14] : memref<1x8xf32, #tpu.memory_space<vmem>>, vector<1x8xf32>
      %17 = vector.broadcast %16 : vector<1x8xf32> to vector<8x8xf32>
      %18 = arith.addf %15, %17 : vector<8x8xf32>
      %19 = arith.negf %18 : vector<8x8xf32>
      %20 = math.exp %19 : vector<8x8xf32>
      %cst_15 = arith.constant 1.000000e+00 : f32
      %21 = vector.broadcast %cst_15 : f32 to vector<8x8xf32>
      %22 = arith.addf %21, %20 : vector<8x8xf32>
      %23 = arith.divf %21, %22 : vector<8x8xf32>
      %c0_16 = arith.constant 0 : index
      %c0_17 = arith.constant 0 : index
      %24 = vector.load %arg6[%c0_16, %c0_17] : memref<8x8xf32, #tpu.memory_space<vmem>>, vector<8x8xf32>
      tpu.vector_store %arg6[%c0_16, %c0_17], %23 {strides = array<i32>} : memref<8x8xf32, #tpu.memory_space<vmem>>, vector<8x8xf32>,
    } else {
    }
    return
  }
  func.func @transform_0(%arg0: i32, %arg1: i32, %arg2: i32) -> (i32, i32, i32) {
    %c0_i32 = arith.constant 0 : i32
    return %arg0, %arg1, %arg2 : i32, i32, i32
  }
  func.func @transform_1(%arg0: i32, %arg1: i32, %arg2: i32) -> (i32, i32) {
    %c0_i32 = arith.constant 0 : i32
    return %arg1, %arg2 : i32, i32
  }
  func.func @transform_2(%arg0: i32, %arg1: i32, %arg2: i32) -> (i32, i32) {
    %c0_i32 = arith.constant 0 : i32
    %c0_i32_0 = arith.constant 0 : i32
    return %c0_i32, %arg1 : i32, i32
  }
  func.func @transform_3(%arg0: i32, %arg1: i32, %arg2: i32) -> (i32, i32) {
    %c0_i32 = arith.constant 0 : i32
    return %arg0, %arg1 : i32, i32
  }
}

</mosaic_0001>

<llo_original>
// kernel: tpu_custom_call.1
$region0: #{tpu_custom_call.1}
  #allocation0 [shape = 'u32[]', space=smem, size = 0x4, offset = 0x4, fixed_abs, tag = 'smem constant byte address 0x4 - core index']
  #allocation1 [shape = 'u32[144,128]{1,0:T(1,128)}', space=vmem, size = 0x12000, scoped, tag = 'internal scratch']
  #allocation2 [shape = 'f32[8,8]{1,0:T(8,128)}', space=vmem, size = 0x1000, scoped, tag = 'scratch operand']
  %s0 = inlined_call_operand.hbm [shape: f32[8,8,128], index: 0, kind: input, shape index: {}]
  %s1 = inlined_call_operand.hbm [shape: f32[8,128], index: 1, kind: input, shape index: {}]
  %s2 = inlined_call_operand.vmem [shape: f32[1,8], index: 2, kind: input, shape index: {}]
  %s3 = inlined_call_operand.hbm [shape: f32[8,8], index: 3, kind: output, shape index: {}]
  %s4 = sld [smem:[#allocation0]]
  $region38: #{tpu_custom_call.1} parent=0
    _
  %s6 = ssub.s32 1, %s4
  %s7 = scalar_select 0, %s6, %s4
  $region1: #{tpu_custom_call.1} parent=0
    #allocation3 [shape = 'u8[32768]{0}', space=vmem, size = 0x8000, scoped, tag = 'input window, operand 0, single buffered']
    #allocation4 [shape = 's32[1]{0}', space=sflag, size = 0x4, scoped, tag = 'scoped memory for tpu_custom_call.1']
    #allocation5 [shape = 's32[1]{0}', space=sflag, size = 0x4, scoped, tag = 'scoped memory for tpu_custom_call.1']
    #allocation6 [shape = 'u8[4096]{0}', space=vmem, size = 0x1000, scoped, tag = 'input window, operand 1, single buffered']
    #allocation7 [shape = 's32[1]{0}', space=sflag, size = 0x4, scoped, tag = 'scoped memory for tpu_custom_call.1']
    #allocation8 [shape = 'u8[4096]{0}', space=vmem, size = 0x1000, scoped, tag = 'output window, operand 0, single buffered']
    %8 = vsyncpa [#allocation4], 0
    %9 = vsyncpa [#allocation7], 0
    %10 = vsyncpa [#allocation5], 0
    // Predicated region
    $region2: #{tpu_custom_call.1} parent=1 // pred_check
      _
    $region3: #{tpu_custom_call.1} parent=1 // pred_check_branch
      %12 = sbr.rel (0) target = $region5
    $region4: #{tpu_custom_call.1} parent=1 // pred_region
      %s14 = ssub.s32 1024, 1024
      %15 = vsyncadd [#allocation4], %s14
      %s16 = sshll.u32 [#allocation3], 4
      %s17 = int_to_ptr.vmem [resolvable:$true] %s16
      %22 = dma.hbm_to_vmem [thread:$0]  %s0, 1024, %s17, [#allocation4], 128, 128, 8
    $region5: #{tpu_custom_call.1} parent=1 // pred_fallthru
      _
    // Predicated region
    $region6: #{tpu_custom_call.1} parent=1 // pred_check
      _
    $region7: #{tpu_custom_call.1} parent=1 // pred_check_branch
      %24 = sbr.rel (0) target = $region9
    $region8: #{tpu_custom_call.1} parent=1 // pred_region
      %s26 = ssub.s32 128, 128
      %27 = vsyncadd [#allocation7], %s26
      %s29 = sshll.u32 [#allocation6], 4
      %s30 = int_to_ptr.vmem [resolvable:$true] %s29
      %32 = dma.hbm_to_vmem [thread:$0]  %s1, 128, %s30, [#allocation7]
    $region9: #{tpu_custom_call.1} parent=1 // pred_fallthru
      _
    // Predicated region
    $region10: #{tpu_custom_call.1} parent=1 // pred_check
      _
    $region11: #{tpu_custom_call.1} parent=1 // pred_check_branch
      %34 = sbr.rel (0) target = $region13
    $region12: #{tpu_custom_call.1} parent=1 // pred_region
      _
    $region13: #{tpu_custom_call.1} parent=1 // pred_fallthru
      _
    // Predicated region
    $region14: #{tpu_custom_call.1} parent=1 // pred_check
      _
    $region15: #{tpu_custom_call.1} parent=1 // pred_check_branch
      %36 = sbr.rel (0) target = $region17
    $region16: #{tpu_custom_call.1} parent=1 // pred_region
      %37 = dma.done [#allocation4], 1024
    $region17: #{tpu_custom_call.1} parent=1 // pred_fallthru
      _
    // Predicated region
    $region18: #{tpu_custom_call.1} parent=1 // pred_check
      _
    $region19: #{tpu_custom_call.1} parent=1 // pred_check_branch
      %39 = sbr.rel (0) target = $region21
    $region20: #{tpu_custom_call.1} parent=1 // pred_region
      %40 = dma.done [#allocation7], 128
    $region21: #{tpu_custom_call.1} parent=1 // pred_fallthru
      _
    %p41 = scmp.eq.s32.totalorder 0, 0
    // Predicated region
    $region22: #{tpu_custom_call.1} parent=1 // pred_check
      %p42 = pneg %p41
    $region23: #{tpu_custom_call.1} parent=1 // pred_check_branch
      %44 = sbr.rel (%p42) target = $region25
    $region24: #{tpu_custom_call.1} parent=1 // pred_region
      %vm45 = vcmask 64512
      %46 = vst.msk [vmem:[#allocation2] sm:$0xff] %vm45, 0.0
    $region25: #{tpu_custom_call.1} parent=1 // pred_fallthru
      _
    %v47 = vld [vmem:[#allocation3] sm:$0xff]
    %v48 = vld [vmem:[#allocation3 + $0x8] sm:$0xff]
    %v49 = vld [vmem:[#allocation3 + $0x10] sm:$0xff]
    %v50 = vld [vmem:[#allocation3 + $0x18] sm:$0xff]
    %v51 = vld [vmem:[#allocation3 + $0x20] sm:$0xff]
    %v52 = vld [vmem:[#allocation3 + $0x28] sm:$0xff]
    %v53 = vld [vmem:[#allocation3 + $0x30] sm:$0xff]
    %v54 = vld [vmem:[#allocation3 + $0x38] sm:$0xff]
    %v55 = vld [vmem:[#allocation6] sm:$0xff]
    %v56 = vld [vmem:[#allocation2] sm:$0xff]
    %v57 = vmul.f32 %v47, %v55
    %v58 = vmul.f32 %v48, %v55
    %v59 = vmul.f32 %v49, %v55
    %v60 = vmul.f32 %v50, %v55
    %v61 = vmul.f32 %v51, %v55
    %v62 = vmul.f32 %v52, %v55
    %v63 = vmul.f32 %v53, %v55
    %v64 = vmul.f32 %v54, %v55
    %65 = vadd.xlane.f32.xlu0 %v57
    %v66 = vpop.xlane.xlu0 %65
    %67 = vadd.xlane.f32.xlu0 %v58
    %v68 = vpop.xlane.xlu0 %67
    %69 = vadd.xlane.f32.xlu0 %v59
    %v70 = vpop.xlane.xlu0 %69
    %71 = vadd.xlane.f32.xlu0 %v60
    %v72 = vpop.xlane.xlu0 %71
    %73 = vadd.xlane.f32.xlu0 %v61
    %v74 = vpop.xlane.xlu0 %73
    %75 = vadd.xlane.f32.xlu0 %v62
    %v76 = vpop.xlane.xlu0 %75
    %77 = vadd.xlane.f32.xlu0 %v63
    %v78 = vpop.xlane.xlu0 %77
    %79 = vadd.xlane.f32.xlu0 %v64
    %v80 = vpop.xlane.xlu0 %79
    %v89 = vlaneseq
    %v90 = vand.u32 %v89, 127
    %v91 = vlaneseq
    %v92 = vshrl.u32 %v91, 7
    %v93 = vsub.s32 %v90, %v92
    %v94 = vrot.slane %v66, %v93
    %v95 = vlaneseq
    %v96 = vshrl.u32 %v95, 7
    %v97 = vsub.s32 %v90, %v96
    %v98 = vrot.slane %v68, %v97
    %v99 = vlaneseq
    %v100 = vshrl.u32 %v99, 7
    %v101 = vsub.s32 %v90, %v100
    %v102 = vrot.slane %v70, %v101
    %v103 = vlaneseq
    %v104 = vshrl.u32 %v103, 7
    %v105 = vsub.s32 %v90, %v104
    %v106 = vrot.slane %v72, %v105
    %v107 = vlaneseq
    %v108 = vshrl.u32 %v107, 7
    %v109 = vsub.s32 %v90, %v108
    %v110 = vrot.slane %v74, %v109
    %v111 = vlaneseq
    %v112 = vshrl.u32 %v111, 7
    %v113 = vsub.s32 %v90, %v112
    %v114 = vrot.slane %v76, %v113
    %v115 = vlaneseq
    %v116 = vshrl.u32 %v115, 7
    %v117 = vsub.s32 %v90, %v116
    %v118 = vrot.slane %v78, %v117
    %v119 = vlaneseq
    %v120 = vshrl.u32 %v119, 7
    %v121 = vsub.s32 %v90, %v120
    %v122 = vrot.slane %v80, %v121
    %vm123 = vcmask 1041409
    %v124 = vsel %vm123, %v98, %v94
    %vm125 = vcmask 1042434
    %v126 = vsel %vm125, %v102, %v124
    %vm127 = vcmask 1043459
    %v128 = vsel %vm127, %v106, %v126
    %vm129 = vcmask 1044484
    %v130 = vsel %vm129, %v110, %v128
    %vm131 = vcmask 1045509
    %v132 = vsel %vm131, %v114, %v130
    %vm133 = vcmask 1046534
    %v134 = vsel %vm133, %v118, %v132
    %vm135 = vcmask 1047559
    %v136 = vsel %vm135, %v122, %v134
    %v138 = vadd.f32 %v56, %v136
    %vm139 = vcmask 64512
    %140 = vst.msk [vmem:[#allocation2] sm:$0xff] %vm139, %v138
    // Predicated region
    $region26: #{tpu_custom_call.1} parent=1 // pred_check
      %p141 = pneg %p41
    $region27: #{tpu_custom_call.1} parent=1 // pred_check_branch
      %143 = sbr.rel (%p141) target = $region29
    $region28: #{tpu_custom_call.1} parent=1 // pred_region
      %v144 = vld [vmem:[#allocation2] sm:$0xff]
      %v145 = vld [vmem:[%s2] sm:$0x1]
      %v147 = vlaneseq
      %v148 = vshrl.u32 %v147, 7
      %v149 = vsub.s32 0, %v148
      %v150 = vrot.slane %v145, %v149
      %v152 = vadd.f32 %v144, %v150
      %v153 = vxor.u32 %v152, 2147483648
      %v154 = vmul.f32 %v153, 1.442695
      %v155 = vpow.pop %v154
      %v156 = vadd.f32 %v155, 1.0
      %v157 = vrcp.pop %v156
      %v158 = vmul.f32 1.0, %v157
      %159 = vst.msk [vmem:[#allocation8] sm:$0xff] %vm139, %v158
    $region29: #{tpu_custom_call.1} parent=1 // pred_fallthru
      _
    // Predicated region
    $region30: #{tpu_custom_call.1} parent=1 // pred_check
      _
    $region31: #{tpu_custom_call.1} parent=1 // pred_check_branch
      %161 = sbr.rel (0) target = $region33
    $region32: #{tpu_custom_call.1} parent=1 // pred_region
      %s163 = ssub.s32 128, 128
      %164 = vsyncadd [#allocation5], %s163
      %s166 = sshll.u32 [#allocation8], 4
      %s167 = int_to_ptr.vmem [resolvable:$true] %s166
      %169 = dma.vmem_to_hbm [thread:$0]  %s167, 128, %s3, [#allocation5]
    $region33: #{tpu_custom_call.1} parent=1 // pred_fallthru
      _
    // Predicated region
    $region34: #{tpu_custom_call.1} parent=1 // pred_check
      _
    $region35: #{tpu_custom_call.1} parent=1 // pred_check_branch
      %171 = sbr.rel (0) target = $region37
    $region36: #{tpu_custom_call.1} parent=1 // pred_region
      %172 = dma.done [#allocation5], 128
    $region37: #{tpu_custom_call.1} parent=1 // pred_fallthru
      _
    %173 = vsyncpa [#allocation4], 1
    %174 = vsyncpa [#allocation7], 1
    %175 = vsyncpa [#allocation5], 1

</llo_original>
